<compile_context>
chip_gen: v6e
topology: v6e:2x2x1
jax: 0.10.0
libtpu: 0.0.40
codegen_flags: <defaults>
</compile_context>

<pallas_src>
import jax
import jax.numpy as jnp
from jax.experimental import pallas as pl
from jax.experimental.pallas import tpu as pltpu


def _bce_loss_duie_kernel(w_ref, x_ref, y_ref, out_ref):
    # The output block for the current partial stays resident across the inner
    # ("arbitrary") reduction axis: zero it on the first inner step, accumulate
    # on every step.
    @pl.when(pl.program_id(1) == 0)
    def _():
        out_ref[...] = jnp.zeros_like(out_ref)

    x = x_ref[...].astype(jnp.float32)   # (TILE, C) logits (any input dtype)
    y = y_ref[...].astype(jnp.float32)   # (TILE, C) 0/1 labels
    w = w_ref[...].astype(jnp.float32)   # (TILE, 1) mask/(B*C*tok_cnt), 0 on padding

    # Numerically-stable BCE-with-logits: max(x,0) - x*y + log1p(exp(-|x|)).
    # log1p written with exp/log/where (for tiny z, log1p(z) == z to f32 precision),
    # avoiding any dependence on a log1p lowering while keeping its accuracy.
    z = jnp.exp(-jnp.abs(x))
    softplus = jnp.where(z < 1e-6, z, jnp.log(1.0 + z))
    loss = jnp.maximum(x, 0.0) - x * y + softplus

    # Reduce class axis first (fewer multiplies), then weight per row and reduce.
    row = jnp.sum(loss, axis=1, keepdims=True)        # (TILE, 1)
    part = jnp.sum(row * w, axis=0, keepdims=True)    # (1, 1)
    out_ref[...] += part                              # broadcast into the (8,128) block


def _round_up(x, m):
    return (x + m - 1) // m * m


def bce_loss_duie(logits, labels, mask, *, tile_rows=2048, num_partials=2):
    """Pallas TPU implementation of BCELossForDuIE.forward.

    logits, labels: (B, S, C); mask: (B, S). Returns a scalar f32 loss.
    Inputs may be f32 / bf16 / integer labels; everything is cast to f32 in-kernel.
    """
    B, S, C = logits.shape
    mf = mask.astype(jnp.float32)
    tok_cnt = jnp.sum(mf, axis=1, keepdims=True)          # (B, 1)
    # NOTE: an all-zero mask row yields inf/NaN, exactly like the PyTorch reference.
    w = mf / (tok_cnt * jnp.float32(B * C))               # (B, S)

    N = B * S
    x2 = logits.reshape(N, C)
    y2 = labels.reshape(N, C)
    w2 = w.reshape(N, 1)

    # Grid: (partials, reduction). The leading "parallel" axis lets v7x's two
    # TensorCores each own a disjoint partial-sum output block; on v5e/v6e it is
    # just sequential and costs nothing.
    P = max(1, int(num_partials))
    tile = min(tile_rows, max(8, pl.next_power_of_2(pl.cdiv(N, P))))
    tile = _round_up(tile, 8)                             # sublane-aligned row tile
    Np = _round_up(N, P * tile)
    if Np != N:
        pad = Np - N
        # Zero padding: padded rows get weight 0, and bce(0,0)=log(2) * 0 = 0.
        x2 = jnp.pad(x2, ((0, pad), (0, 0)))
        y2 = jnp.pad(y2, ((0, pad), (0, 0)))
        w2 = jnp.pad(w2, ((0, pad), (0, 0)))
    g_inner = Np // (P * tile)

    # (tile, C) blocks cover the full class dim -> each block is a contiguous HBM
    # chunk, so the mem-bound kernel streams at the DMA roofline with BlockSpec
    # double-buffering regardless of C's lane occupancy.
    out = pl.pallas_call(
        _bce_loss_duie_kernel,
        out_shape=jax.ShapeDtypeStruct((P * 8, 128), jnp.float32),
        grid=(P, g_inner),
        in_specs=[
            pl.BlockSpec((tile, 1), lambda p, i: (p * g_inner + i, 0)),
            pl.BlockSpec((tile, C), lambda p, i: (p * g_inner + i, 0)),
            pl.BlockSpec((tile, C), lambda p, i: (p * g_inner + i, 0)),
        ],
        out_specs=pl.BlockSpec((8, 128), lambda p, i: (p, 0)),
        compiler_params=pltpu.CompilerParams(
            dimension_semantics=("parallel", "arbitrary"),
        ),
    )(w2, x2, y2)

    # Every element of partial block p holds partial sum p; combine partials.
    partials = out.reshape(P, 8, 128)[:, 0, 0]
    return jnp.sum(partials)


def bce_loss_duie_ref(logits, labels, mask):
    """Pure-JAX reference matching the PyTorch module."""
    x = logits.astype(jnp.float32)
    y = labels.astype(jnp.float32)
    m = mask.astype(jnp.float32)
    loss = jnp.maximum(x, 0.0) - x * y + jnp.log1p(jnp.exp(-jnp.abs(x)))
    loss = loss * m[:, :, None]
    per_ex = jnp.sum(jnp.mean(loss, axis=2), axis=1) / jnp.sum(m, axis=1)
    return jnp.mean(per_ex)


if __name__ == "__main__":
    # Small shapes consistent with DuIE usage: batch=2, seq_len=8, num_classes=32.
    B, S, C = 2, 8, 32
    key = jax.random.PRNGKey(0)
    k1, k2, _ = jax.random.split(key, 3)

    logits = jax.random.normal(k1, (B, S, C), dtype=jnp.float32)
    labels = (jax.random.uniform(k2, (B, S, C)) > 0.5).astype(jnp.float32)
    # Mask: first few tokens valid (nonzero per row to avoid /0, as in real DuIE data).
    valid_len = jnp.array([6, 4], dtype=jnp.int32)
    mask = (jnp.arange(S)[None, :] < valid_len[:, None]).astype(jnp.float32)

    out = bce_loss_duie(logits, labels, mask)
    jax.block_until_ready(out)

    ref = bce_loss_duie_ref(logits, labels, mask)
    assert jnp.allclose(out, ref, atol=1e-5, rtol=1e-5), (out, ref)

    # Reduced-precision inputs (halves HBM traffic for the two big operands);
    # kernel casts to f32 internally, so v5e (no bf16 VPU) is fine too.
    out_bf16 = bce_loss_duie(logits.astype(jnp.bfloat16),
                             labels.astype(jnp.bfloat16), mask)
    jax.block_until_ready(out_bf16)
    assert jnp.allclose(out_bf16, ref, atol=1e-3, rtol=5e-2), (out_bf16, ref)

    print("KERNEL_OK")
</pallas_src>

<mosaic_0001>
module attributes {stable_mosaic.version = 11 : i64} {
  func.func @_bce_loss_duie_kernel(%arg0: i32, %arg1: i32, %arg2: memref<8x1xf32, #tpu.memory_space<vmem>>, %arg3: memref<8x32xf32, #tpu.memory_space<vmem>>, %arg4: memref<8x32xf32, #tpu.memory_space<vmem>>, %arg5: memref<8x128xf32, #tpu.memory_space<vmem>>) attributes {dimension_semantics = [#tpu.dimension_semantics<parallel>, #tpu.dimension_semantics<arbitrary>], iteration_bounds = array<i64: 2, 1>, scalar_prefetch = 0 : i64, scratch_operands = 0 : i64, tpu.core_type = #tpu.core_type<tc>, window_params = [{transform_indices = @transform_0, window_bounds = array<i64: 8, 1>}, {transform_indices = @transform_1, window_bounds = array<i64: 8, 32>}, {transform_indices = @transform_2, window_bounds = array<i64: 8, 32>}, {transform_indices = @transform_3, window_bounds = array<i64: 8, 128>}]} {
    %c0_i32 = arith.constant 0 : i32
    %0 = arith.cmpi eq, %arg1, %c0_i32 : i32
    %1 = arith.extui %0 : i1 to i32
    %c0_i32_0 = arith.constant 0 : i32
    %2 = arith.cmpi ne, %1, %c0_i32_0 : i32
    scf.if %2 {
      %cst_15 = arith.constant 0.000000e+00 : f32
      %30 = vector.broadcast %cst_15 : f32 to vector<8x128xf32>
      %c0_16 = arith.constant 0 : index
      %c0_17 = arith.constant 0 : index
      %31 = vector.load %arg5[%c0_16, %c0_17] : memref<8x128xf32, #tpu.memory_space<vmem>>, vector<8x128xf32>
      tpu.vector_store %arg5[%c0_16, %c0_17], %30 {strides = array<i32>} : memref<8x128xf32, #tpu.memory_space<vmem>>, vector<8x128xf32>,
    } else {
    }
    %c0 = arith.constant 0 : index
    %c0_1 = arith.constant 0 : index
    %3 = vector.load %arg3[%c0, %c0_1] : memref<8x32xf32, #tpu.memory_space<vmem>>, vector<8x32xf32>
    %c0_2 = arith.constant 0 : index
    %c0_3 = arith.constant 0 : index
    %4 = vector.load %arg4[%c0_2, %c0_3] : memref<8x32xf32, #tpu.memory_space<vmem>>, vector<8x32xf32>
    %c0_4 = arith.constant 0 : index
    %c0_5 = arith.constant 0 : index
    %5 = vector.load %arg2[%c0_4, %c0_5] : memref<8x1xf32, #tpu.memory_space<vmem>>, vector<8x1xf32>
    %6 = math.absf %3 : vector<8x32xf32>
    %cst = arith.constant 0.000000e+00 : f32
    %7 = vector.broadcast %cst : f32 to vector<8x32xf32>
    %8 = arith.subf %7, %6 : vector<8x32xf32>
    %9 = math.exp %8 : vector<8x32xf32>
    %cst_6 = arith.constant 9.99999997E-7 : f32
    %10 = vector.broadcast %cst_6 : f32 to vector<8x32xf32>
    %11 = arith.cmpf olt, %9, %10 : vector<8x32xf32>
    %cst_7 = arith.constant 1.000000e+00 : f32
    %12 = vector.broadcast %cst_7 : f32 to vector<8x32xf32>
    %13 = arith.addf %12, %9 : vector<8x32xf32>
    %14 = math.log %13 : vector<8x32xf32>
    %15 = arith.select %11, %9, %14 : vector<8x32xi1>, vector<8x32xf32>
    %cst_8 = arith.constant 0.000000e+00 : f32
    %16 = vector.broadcast %cst_8 : f32 to vector<8x32xf32>
    %17 = arith.maximumf %3, %16 : vector<8x32xf32>
    %18 = arith.mulf %3, %4 : vector<8x32xf32>
    %19 = arith.subf %17, %18 : vector<8x32xf32>
    %20 = arith.addf %19, %15 : vector<8x32xf32>
    %cst_9 = arith.constant dense<0.000000e+00> : vector<8xf32>
    %21 = vector.multi_reduction <add>, %20, %cst_9 [1] : vector<8x32xf32> to vector<8xf32>
    %22 = vector.shape_cast %21 : vector<8xf32> to vector<8x1xf32>
    %23 = arith.mulf %22, %5 : vector<8x1xf32>
    %cst_10 = arith.constant dense<0.000000e+00> : vector<1xf32>
    %24 = vector.multi_reduction <add>, %23, %cst_10 [0] : vector<8x1xf32> to vector<1xf32>
    %25 = vector.shape_cast %24 : vector<1xf32> to vector<1x1xf32>
    %c0_11 = arith.constant 0 : index
    %c0_12 = arith.constant 0 : index
    %26 = vector.load %arg5[%c0_11, %c0_12] : memref<8x128xf32, #tpu.memory_space<vmem>>, vector<8x128xf32>
    %27 = vector.broadcast %25 : vector<1x1xf32> to vector<8x128xf32>
    %28 = arith.addf %26, %27 : vector<8x128xf32>
    %c0_13 = arith.constant 0 : index
    %c0_14 = arith.constant 0 : index
    %29 = vector.load %arg5[%c0_13, %c0_14] : memref<8x128xf32, #tpu.memory_space<vmem>>, vector<8x128xf32>
    tpu.vector_store %arg5[%c0_13, %c0_14], %28 {strides = array<i32>} : memref<8x128xf32, #tpu.memory_space<vmem>>, vector<8x128xf32>,
    return
  }
  func.func @transform_0(%arg0: i32, %arg1: i32) -> (i32, i32) {
    %c1_i32 = arith.constant 1 : i32
    %0 = arith.muli %arg0, %c1_i32 : i32
    %1 = arith.addi %0, %arg1 : i32
    %c0_i32 = arith.constant 0 : i32
    %c0_i32_0 = arith.constant 0 : i32
    return %1, %c0_i32 : i32, i32
  }
  func.func @transform_1(%arg0: i32, %arg1: i32) -> (i32, i32) {
    %c1_i32 = arith.constant 1 : i32
    %0 = arith.muli %arg0, %c1_i32 : i32
    %1 = arith.addi %0, %arg1 : i32
    %c0_i32 = arith.constant 0 : i32
    %c0_i32_0 = arith.constant 0 : i32
    return %1, %c0_i32 : i32, i32
  }
  func.func @transform_2(%arg0: i32, %arg1: i32) -> (i32, i32) {
    %c1_i32 = arith.constant 1 : i32
    %0 = arith.muli %arg0, %c1_i32 : i32
    %1 = arith.addi %0, %arg1 : i32
    %c0_i32 = arith.constant 0 : i32
    %c0_i32_0 = arith.constant 0 : i32
    return %1, %c0_i32 : i32, i32
  }
  func.func @transform_3(%arg0: i32, %arg1: i32) -> (i32, i32) {
    %c0_i32 = arith.constant 0 : i32
    %c0_i32_0 = arith.constant 0 : i32
    return %arg0, %c0_i32 : i32, i32
  }
}

</mosaic_0001>

<llo_original>
// kernel: tpu_custom_call.1
$region0: #{tpu_custom_call.1}
  #allocation0 [shape = 'u32[]', space=smem, size = 0x4, offset = 0x4, fixed_abs, tag = 'smem constant byte address 0x4 - core index']
  #allocation1 [shape = 'u32[144,128]{1,0:T(1,128)}', space=vmem, size = 0x12000, scoped, tag = 'internal scratch']
  %s0 = inlined_call_operand.vmem [shape: f32[16,1], index: 0, kind: input, shape index: {}]
  %s1 = inlined_call_operand.vmem [shape: f32[16,32], index: 1, kind: input, shape index: {}]
  %s2 = inlined_call_operand.hbm [shape: f32[16,32], index: 2, kind: input, shape index: {}]
  %s3 = inlined_call_operand.hbm [shape: f32[16,128], index: 3, kind: output, shape index: {}]
  %s4 = sld [smem:[#allocation0]]
  $region53: #{tpu_custom_call.1} parent=0
    _
  %s6 = ssub.s32 1, %s4
  %s7 = scalar_select 0, %s6, %s4
  $region1: #{tpu_custom_call.1} parent=0
    #allocation2 [shape = 'u8[8192]{0}', space=vmem, size = 0x2000, scoped, tag = 'input window, operand 2']
    #allocation3 [shape = 's32[2]{0}', space=sflag, size = 0x8, scoped, tag = 'scoped memory for tpu_custom_call.1']
    #allocation4 [shape = 's32[2]{0}', space=sflag, size = 0x8, scoped, tag = 'scoped memory for tpu_custom_call.1']
    #allocation5 [shape = 'u8[8192]{0}', space=vmem, size = 0x2000, scoped, tag = 'output window, operand 0']
    %8 = vsyncpa [#allocation3], 0
    %s9 = scalar_lea.sflag [#allocation3], 1
    %10 = vsyncpa %s9, 0
    %11 = vsyncpa [#allocation4], 0
    %s12 = scalar_lea.sflag [#allocation4], 1
    %13 = vsyncpa %s12, 0
    loop: start=0, step=1, limit=4
    $region2: #{tpu_custom_call.1} parent=1 // loop_pre_header
      _
    $region3: #{tpu_custom_call.1} parent=1 // loop_header
      %s15 = sphi 0, %s19
      %p16 = scmp.ge.s32.totalorder %s15, 4
      %s22 = sphi 0, %s34
      %s23 = sphi 0, %s30
      %s24 = sphi 0, %s22
      %s25 = sphi 0, %s23
      %s26 = sphi 0, %s24
      %s27 = sphi 0, %s25
      %s39 = sphi 0, %s41
      %s42 = sphi 0, %s39
      %s43 = sphi 0, %s42
      %s59 = sphi 0, %s43
      %s67 = sphi 0, %s69
      %s70 = sphi 0, %s67
      %s71 = sphi 0, %s70
      %s87 = sphi 0, %s71
      %s95 = sphi 0, %s97
      %s98 = sphi 0, %s95
      %s99 = sphi 0, %s98
      %s115 = sphi 0, %s99
      %s121 = sphi 0, %s123
      %s124 = sphi 0, %s121
      %s125 = sphi 0, %s124
      %s141 = sphi 0, %s125
    $region4: #{tpu_custom_call.1} parent=1 // loop_header_branch
      %18 = sbr.rel (%p16) target = $region8
    $region5: #{tpu_custom_call.1} parent=1 // loop_body
      %s20 = ssub.s32 %s15, 1
      %s21 = ssub.s32 %s15, 2
      %s28 = sadd.s32 1, %s23
      %p29 = scmp.ge.s32.totalorder %s28, 1
      %s30 = scalar_select %p29, 0, %s28
      %s31 = sadd.s32 1, %s22
      %s32 = scalar_select %p29, %s31, %s22
      %p33 = scmp.ge.s32.totalorder %s32, 2
      %s34 = scalar_select %p33, 0, %s32
      %s35 = sadd.s32 %s22, %s23
      %s36 = sadd.s32 %s34, %s30
      %s37 = ssub.s32 %s35, %s36
      %p38 = scmp.eq.s32.totalorder %s37, 0
      %s40 = sadd.s32 %s39, 1
      %s41 = scalar_select %p38, %s39, %s40
      %p44 = pneg %p38
      %p45 = scmp.eq.s32.totalorder %s15, 1
      %p46 = por %p44, %p45
      %p47 = scmp.ne.s32.totalorder %s39, %s42
      %p48 = scmp.eq.s32.totalorder %s15, 0
      %p49 = por %p47, %p48
      %p50 = scmp.ne.s32.totalorder %s39, %s42
      %p51 = scmp.eq.s32.totalorder %s20, 1
      %p52 = por %p50, %p51
      %p53 = scmp.ne.s32.totalorder %s42, %s43
      %p54 = scmp.eq.s32.totalorder %s20, 0
      %p55 = por %p53, %p54
      %p56 = scmp.ne.s32.totalorder %s42, %s43
      %p57 = scmp.eq.s32.totalorder %s21, 1
      %p58 = por %p56, %p57
      %p60 = scmp.ne.s32.totalorder %s43, %s59
      %p61 = scmp.eq.s32.totalorder %s21, 0
      %p62 = por %p60, %p61
      %s63 = sadd.s32 %s22, %s23
      %s64 = sadd.s32 %s34, %s30
      %s65 = ssub.s32 %s63, %s64
      %p66 = scmp.eq.s32.totalorder %s65, 0
      %s68 = sadd.s32 %s67, 1
      %s69 = scalar_select %p66, %s67, %s68
      %p72 = pneg %p66
      %p73 = scmp.eq.s32.totalorder %s15, 1
      %p74 = por %p72, %p73
      %p75 = scmp.ne.s32.totalorder %s67, %s70
      %p76 = scmp.eq.s32.totalorder %s15, 0
      %p77 = por %p75, %p76
      %p78 = scmp.ne.s32.totalorder %s67, %s70
      %p79 = scmp.eq.s32.totalorder %s20, 1
      %p80 = por %p78, %p79
      %p81 = scmp.ne.s32.totalorder %s70, %s71
      %p82 = scmp.eq.s32.totalorder %s20, 0
      %p83 = por %p81, %p82
      %p84 = scmp.ne.s32.totalorder %s70, %s71
      %p85 = scmp.eq.s32.totalorder %s21, 1
      %p86 = por %p84, %p85
      %p88 = scmp.ne.s32.totalorder %s71, %s87
      %p89 = scmp.eq.s32.totalorder %s21, 0
      %p90 = por %p88, %p89
      %s91 = sadd.s32 %s22, %s23
      %s92 = sadd.s32 %s34, %s30
      %s93 = ssub.s32 %s91, %s92
      %p94 = scmp.eq.s32.totalorder %s93, 0
      %s96 = sadd.s32 %s95, 1
      %s97 = scalar_select %p94, %s95, %s96
      %p100 = pneg %p94
      %p101 = scmp.eq.s32.totalorder %s15, 1
      %p102 = por %p100, %p101
      %p103 = scmp.ne.s32.totalorder %s95, %s98
      %p104 = scmp.eq.s32.totalorder %s15, 0
      %p105 = por %p103, %p104
      %p106 = scmp.ne.s32.totalorder %s95, %s98
      %p107 = scmp.eq.s32.totalorder %s20, 1
      %p108 = por %p106, %p107
      %p109 = scmp.ne.s32.totalorder %s98, %s99
      %p110 = scmp.eq.s32.totalorder %s20, 0
      %p111 = por %p109, %p110
      %p112 = scmp.ne.s32.totalorder %s98, %s99
      %p113 = scmp.eq.s32.totalorder %s21, 1
      %p114 = por %p112, %p113
      %p116 = scmp.ne.s32.totalorder %s99, %s115
      %p117 = scmp.eq.s32.totalorder %s21, 0
      %p118 = por %p116, %p117
      %s119 = ssub.s32 %s22, %s34
      %p120 = scmp.eq.s32.totalorder %s119, 0
      %s122 = sadd.s32 %s121, 1
      %s123 = scalar_select %p120, %s121, %s122
      %p126 = pneg %p120
      %p127 = scmp.eq.s32.totalorder %s15, 1
      %p128 = por %p126, %p127
      %p129 = scmp.ne.s32.totalorder %s121, %s124
      %p130 = scmp.eq.s32.totalorder %s15, 0
      %p131 = por %p129, %p130
      %p132 = scmp.ne.s32.totalorder %s121, %s124
      %p133 = scmp.eq.s32.totalorder %s20, 1
      %p134 = por %p132, %p133
      %p135 = scmp.ne.s32.totalorder %s124, %s125
      %p136 = scmp.eq.s32.totalorder %s20, 0
      %p137 = por %p135, %p136
      %p138 = scmp.ne.s32.totalorder %s124, %s125
      %p139 = scmp.eq.s32.totalorder %s21, 1
      %p140 = por %p138, %p139
      %p142 = scmp.ne.s32.totalorder %s125, %s141
      %p143 = scmp.eq.s32.totalorder %s21, 0
      %p144 = por %p142, %p143
      %p145 = scmp.le.s32.totalorder 1, %s15
      %p146 = scmp.lt.s32.totalorder %s15, 3
      %p147 = pnand %p145, %p146
      %p148 = pneg %p147
      // Predicated region
      $region9: #{tpu_custom_call.1} parent=5 // pred_check
        _
      $region10: #{tpu_custom_call.1} parent=5 // pred_check_branch
        %150 = sbr.rel (%p147) target = $region12
      $region11: #{tpu_custom_call.1} parent=5 // pred_region
        %s151 = ssub.s32 %s15, 1
      $region12: #{tpu_custom_call.1} parent=5 // pred_fallthru
        _
      %p152 = scmp.lt.s32.totalorder %s15, 2
      // Predicated region
      $region13: #{tpu_custom_call.1} parent=5 // pred_check
        %p153 = pneg %p152
      $region14: #{tpu_custom_call.1} parent=5 // pred_check_branch
        %155 = sbr.rel (%p153) target = $region16
      $region15: #{tpu_custom_call.1} parent=5 // pred_region
        // Predicated region
        $region17: #{tpu_custom_call.1} parent=15 // pred_check
          %p156 = pneg %p49
        $region18: #{tpu_custom_call.1} parent=15 // pred_check_branch
          %158 = sbr.rel (%p156) target = $region20
        $region19: #{tpu_custom_call.1} parent=15 // pred_region
          %s159 = sadd.s32 %s22, %s23
          %p160 = scmp.lt.s32.totalorder %s159, 1
          %s161 = scalar_select %p160, %s159, 1
          %s162 = smul.addr %s161, 8
          %s163 = scalar_lea.vmem %s0, %s162
          %s164 = sadd.s32 %s22, %s23
        $region20: #{tpu_custom_call.1} parent=15 // pred_fallthru
          _
        // Predicated region
        $region21: #{tpu_custom_call.1} parent=15 // pred_check
          %p165 = pneg %p77
        $region22: #{tpu_custom_call.1} parent=15 // pred_check_branch
          %167 = sbr.rel (%p165) target = $region24
        $region23: #{tpu_custom_call.1} parent=15 // pred_region
          %s168 = sadd.s32 %s22, %s23
          %p169 = scmp.lt.s32.totalorder %s168, 1
          %s170 = scalar_select %p169, %s168, 1
          %s171 = smul.addr %s170, 8
          %s172 = scalar_lea.vmem %s1, %s171
          %s173 = sadd.s32 %s22, %s23
        $region24: #{tpu_custom_call.1} parent=15 // pred_fallthru
          _
        // Predicated region
        $region25: #{tpu_custom_call.1} parent=15 // pred_check
          %p174 = pneg %p105
        $region26: #{tpu_custom_call.1} parent=15 // pred_check_branch
          %176 = sbr.rel (%p174) target = $region28
        $region27: #{tpu_custom_call.1} parent=15 // pred_region
          %s177 = sand.u32 %s95, 1
          %s178 = scalar_lea.sflag [#allocation3], %s177
          %s179 = sand.u32 %s95, 1
          %s180 = smul.addr %s179, 8
          %s181 = scalar_lea.vmem [#allocation2], %s180
          %s182 = sadd.s32 %s22, %s23
          %s184 = ssub.s32 128, 128
          %185 = vsyncadd %s178, %s184
          %s186 = smul.addr %s182, 128
          %s187 = scalar_lea.hbm %s2, %s186
          %s189 = sshll.u32 %s181, 4
          %s190 = int_to_ptr.vmem [resolvable:$true] %s189
          %192 = dma.hbm_to_vmem [thread:$0]  %s187, 128, %s190, %s178
        $region28: #{tpu_custom_call.1} parent=15 // pred_fallthru
          _
      $region16: #{tpu_custom_call.1} parent=5 // pred_fallthru
        _
      %p193 = scmp.le.s32.totalorder 1, %s15
      %p194 = scmp.lt.s32.totalorder %s15, 3
      %p195 = pnand %p193, %p194
      %p196 = pneg %p195
      // Predicated region
      $region29: #{tpu_custom_call.1} parent=5 // pred_check
        _
      $region30: #{tpu_custom_call.1} parent=5 // pred_check_branch
        %198 = sbr.rel (%p195) target = $region32
      $region31: #{tpu_custom_call.1} parent=5 // pred_region
        %s199 = ssub.s32 %s15, 1
        %s200 = sand.u32 %s98, 1
        %s201 = scalar_lea.sflag [#allocation3], %s200
        %s202 = sand.u32 %s98, 1
        %s203 = smul.addr %s202, 8
        %s204 = scalar_lea.vmem [#allocation2], %s203
        // Predicated region
        $region33: #{tpu_custom_call.1} parent=31 // pred_check
          %p205 = pneg %p111
        $region34: #{tpu_custom_call.1} parent=31 // pred_check_branch
          %207 = sbr.rel (%p205) target = $region36
        $region35: #{tpu_custom_call.1} parent=31 // pred_region
          %208 = dma.done %s201, 128
        $region36: #{tpu_custom_call.1} parent=31 // pred_fallthru
          _
        %s209 = sadd.s32 %s24, %s25
        %p210 = scmp.lt.s32.totalorder %s209, 1
        %s211 = scalar_select %p210, %s209, 1
        %s212 = smul.addr %s211, 8
        %s213 = scalar_lea.vmem %s0, %s212
        %p214 = pneg %p55
        %p215 = pneg %p52
        %s216 = sadd.s32 %s24, %s25
        %p217 = scmp.lt.s32.totalorder %s216, 1
        %s218 = scalar_select %p217, %s216, 1
        %s219 = smul.addr %s218, 8
        %s220 = scalar_lea.vmem %s1, %s219
        %p221 = pneg %p83
        %p222 = pneg %p80
        %s223 = sand.u32 %s98, 1
        %s224 = scalar_lea.sflag [#allocation3], %s223
        %s225 = sand.u32 %s98, 1
        %s226 = smul.addr %s225, 8
        %s227 = scalar_lea.vmem [#allocation2], %s226
        %p228 = pneg %p111
        %p229 = pneg %p108
        %p230 = pneg %p137
        %p231 = pneg %p134
        %s232 = sand.u32 %s124, 1
        %s233 = scalar_lea.sflag [#allocation4], %s232
        %s234 = sand.u32 %s124, 1
        %s235 = smul.addr %s234, 8
        %s236 = scalar_lea.vmem [#allocation5], %s235
        %s237 = sadd.s32 %s24, %s25
        %p238 = scmp.lt.s32.totalorder %s237, 1
        %s239 = scalar_select %p238, %s237, 1
        %s240 = smul.addr %s239, 8
        %s241 = scalar_lea.vmem %s0, %s240
        %s242 = sadd.s32 %s24, %s25
        %s243 = sadd.s32 %s24, %s25
        %p244 = scmp.lt.s32.totalorder %s243, 1
        %s245 = scalar_select %p244, %s243, 1
        %s246 = smul.addr %s245, 8
        %s247 = scalar_lea.vmem %s1, %s246
        %s248 = sadd.s32 %s24, %s25
        %s249 = sadd.s32 %s24, %s25
        %p250 = scmp.eq.s32.totalorder %s25, 0
        // Predicated region
        $region37: #{tpu_custom_call.1} parent=31 // pred_check
          %p251 = pneg %p250
        $region38: #{tpu_custom_call.1} parent=31 // pred_check_branch
          %253 = sbr.rel (%p251) target = $region40
        $region39: #{tpu_custom_call.1} parent=31 // pred_region
          %254 = vst [vmem:[%s236] sm:$0xff] 0.0
        $region40: #{tpu_custom_call.1} parent=31 // pred_fallthru
          _
        %v255 = vld [vmem:[%s247] sm:$0xff]
        %v256 = vld [vmem:[%s204] sm:$0xff]
        %v257 = vld [vmem:[%s241] sm:$0xff]
        %v258 = vand.u32 2147483647, %v255
        %v259 = vsub.f32 0.0, %v258
        %v260 = vmul.f32 %v259, 1.442695
        %v261 = vpow.pop %v260
        %vm262 = vcmp.lt.f32.partialorder %v261, 1e-06
        %v263 = vadd.f32 %v261, 1.0
        %v264 = vlog2.pop %v263
        %v265 = vmul.f32 %v264, 0.6931472
        %v266 = vsel %vm262, %v261, %v265
        %v267 = vmax.f32 %v255, 0.0
        %v268 = vmul.f32 %v255, %v256
        %v269 = vsub.f32 %v267, %v268
        %v270 = vadd.f32 %v269, %v266
        %vm271 = vcmask 261120
        %v272 = vsel %vm271, %v270, 0.0
        %273 = vadd.xlane.f32.xlu0 %v272
        %v274 = vpop.xlane.xlu0 %273
        %v275 = vmul.f32 %v274, %v257
        %vm276 = vcmask 7168
        %v277 = vsel %vm276, %v275, 0.0
        %v278 = vrot.slane %v277, 4
        %v279 = vadd.f32 %v277, %v278
        %v280 = vrot.slane %v279, 2
        %v281 = vadd.f32 %v279, %v280
        %v282 = vrot.slane %v281, 1
        %v283 = vadd.f32 %v281, %v282
        %v284 = vld [vmem:[%s236] sm:$0xff]
        %286 = vset.pattern.permute.xlu0 0
        %287 = vperm.xlu0 %286, %v283
        %v288 = vpop.permute.xlu0 %287
        %v290 = vadd.f32 %v284, %v288
        %291 = vst [vmem:[%s236] sm:$0xff] %v290
        %s292 = sand.u32 %s124, 1
        %s293 = scalar_lea.sflag [#allocation4], %s292
        %s294 = sand.u32 %s124, 1
        %s295 = smul.addr %s294, 8
        %s296 = scalar_lea.vmem [#allocation5], %s295
        // Predicated region
        $region41: #{tpu_custom_call.1} parent=31 // pred_check
          %p297 = pneg %p134
        $region42: #{tpu_custom_call.1} parent=31 // pred_check_branch
          %299 = sbr.rel (%p297) target = $region44
        $region43: #{tpu_custom_call.1} parent=31 // pred_region
          %s301 = ssub.s32 128, 128
          %302 = vsyncadd %s293, %s301
          %s303 = smul.addr %s24, 128
          %s304 = scalar_lea.hbm %s3, %s303
          %s306 = sshll.u32 %s296, 4
          %s307 = int_to_ptr.vmem [resolvable:$true] %s306
          %309 = dma.vmem_to_hbm [thread:$0]  %s307, 128, %s304, %s293
        $region44: #{tpu_custom_call.1} parent=31 // pred_fallthru
          _
      $region32: #{tpu_custom_call.1} parent=5 // pred_fallthru
        _
      %p310 = scmp.le.s32.totalorder 2, %s15
      // Predicated region
      $region45: #{tpu_custom_call.1} parent=5 // pred_check
        %p311 = pneg %p310
      $region46: #{tpu_custom_call.1} parent=5 // pred_check_branch
        %313 = sbr.rel (%p311) target = $region48
      $region47: #{tpu_custom_call.1} parent=5 // pred_region
        %s314 = ssub.s32 %s15, 2
        // Predicated region
        $region49: #{tpu_custom_call.1} parent=47 // pred_check
          %p315 = pneg %p140
        $region50: #{tpu_custom_call.1} parent=47 // pred_check_branch
          %317 = sbr.rel (%p315) target = $region52
        $region51: #{tpu_custom_call.1} parent=47 // pred_region
          %s318 = sand.u32 %s125, 1
          %s319 = scalar_lea.sflag [#allocation4], %s318
          %s320 = sand.u32 %s125, 1
          %s321 = smul.addr %s320, 8
          %s322 = scalar_lea.vmem [#allocation5], %s321
          %323 = dma.done %s319, 128
        $region52: #{tpu_custom_call.1} parent=47 // pred_fallthru
          _
      $region48: #{tpu_custom_call.1} parent=5 // pred_fallthru
        _
    $region6: #{tpu_custom_call.1} parent=1 // loop_footer
      %s19 = sadd.s32 1, %s15
    $region7: #{tpu_custom_call.1} parent=1 // loop_footer_branch
      %14 = sbr.rel target = $region3
    $region8: #{tpu_custom_call.1} parent=1 // loop_exit
      _
    %324 = vsyncpa [#allocation3], 1
    %s325 = scalar_lea.sflag [#allocation3], 1
    %326 = vsyncpa %s325, 1
    %327 = vsyncpa [#allocation4], 1
    %s328 = scalar_lea.sflag [#allocation4], 1
    %329 = vsyncpa %s328, 1

</llo_original>
